<compile_context>
chip_gen: v7x
topology: tpu7x:2x2x1
jax: 0.10.0
libtpu: 0.0.40
codegen_flags: <defaults>
</compile_context>

<pallas_src>
import functools
import math

import jax
import jax.numpy as jnp
from jax.experimental import pallas as pl
from jax.experimental.pallas import tpu as pltpu

_EPS = 1e-6
_NEG_INF = -1e30


def _round_up(x: int, m: int) -> int:
    return ((x + m - 1) // m) * m


def _device_defaults():
    """(vmem_limit_bytes, default sequence block) per TPU generation."""
    try:
        kind = jax.devices()[0].device_kind.lower()
    except Exception:  # heuristic only; fall through to conservative defaults
        kind = ""
    if ("v2" in kind) or ("v3" in kind):
        return 12 * 1024 * 1024, 256
    if ("v4" in kind) or ("v5" in kind) or ("v6" in kind):  # 128 MiB VMEM generations
        return 96 * 1024 * 1024, 512
    # v7x (64 MiB VMEM / TC) or unknown generation: conservative.
    return 56 * 1024 * 1024, 256


# --------------------------------------------------------------------------------------
# Kernel A: RMSNorm(attn_in) + fused Q/K/V projections (computed once per token).
# --------------------------------------------------------------------------------------
def _qkv_proj_kernel(x_ref, g_ref, wq_ref, wk_ref, wv_ref, bq_ref, bk_ref, bv_ref,
                     q_ref, k_ref, v_ref, *, d_model: int, head_dim: int):
    f32, bf16 = jnp.float32, jnp.bfloat16
    inv_d = 1.0 / float(d_model)            # real (unpadded) model dim; padded lanes are 0
    scale = 1.0 / math.sqrt(head_dim)       # real (unpadded) head dim

    x = x_ref[0].astype(f32)                                  # (bt, Dp)
    ms = jnp.sum(x * x, axis=-1, keepdims=True) * inv_d
    xn = x * jax.lax.rsqrt(ms + _EPS) * g_ref[...]
    xb = xn.astype(bf16)

    q = jnp.dot(xb, wq_ref[...], preferred_element_type=f32) + bq_ref[...]
    k = jnp.dot(xb, wk_ref[...], preferred_element_type=f32) + bk_ref[...]
    v = jnp.dot(xb, wv_ref[...], preferred_element_type=f32) + bv_ref[...]

    q_ref[0] = (q * scale).astype(q_ref.dtype)   # fold 1/sqrt(hd) into q, store bf16
    k_ref[0] = k.astype(k_ref.dtype)
    v_ref[0] = v.astype(v_ref.dtype)


# --------------------------------------------------------------------------------------
# Kernel B: flash-style streaming attention (online softmax over k-blocks) fused with
# output projection + residual + RMSNorm x2 + MLP + residual + RMSNorm (at the last k step).
# --------------------------------------------------------------------------------------
def _attn_mlp_kernel(x_ref, q_ref, k_ref, v_ref,
                     g_ai_ref, wo_ref, bo_ref, w1_ref, b1_ref, w2_ref, b2_ref,
                     g_ao_ref, g_mi_ref, g_mo_ref,
                     o_ref,
                     m_sc, l_sc, acc_sc,
                     *, d_model: int, t_real, block_k: int):
    f32, bf16 = jnp.float32, jnp.bfloat16
    ki = pl.program_id(2)
    nk = pl.num_programs(2)

    @pl.when(ki == 0)
    def _():
        m_sc[...] = jnp.full(m_sc.shape, _NEG_INF, m_sc.dtype)
        l_sc[...] = jnp.zeros(l_sc.shape, l_sc.dtype)
        acc_sc[...] = jnp.zeros(acc_sc.shape, acc_sc.dtype)

    q = q_ref[0]            # (H, btq, hdp) bf16, already scaled by 1/sqrt(hd)
    k = k_ref[0]            # (H, btk, hdp) bf16
    v = v_ref[0]            # (H, btk, hdp) bf16

    s = jnp.einsum('hqd,hkd->hqk', q, k, preferred_element_type=f32)   # (H, btq, btk)

    if t_real is not None:
        # mask padded key positions (K/V biases make padded rows non-zero)
        kpos = ki * block_k + jax.lax.broadcasted_iota(jnp.int32, (1, 1, s.shape[-1]), 2)
        s = jnp.where(kpos < t_real, s, _NEG_INF)

    m_prev = m_sc[...]
    m_new = jnp.maximum(m_prev, jnp.max(s, axis=-1, keepdims=True))
    alpha = jnp.exp(m_prev - m_new)
    p = jnp.exp(s - m_new)
    l_sc[...] = alpha * l_sc[...] + jnp.sum(p, axis=-1, keepdims=True)
    acc_sc[...] = alpha * acc_sc[...] + jnp.einsum('hqk,hkd->hqd', p.astype(bf16), v,
                                                   preferred_element_type=f32)
    m_sc[...] = m_new

    @pl.when(ki == nk - 1)
    def _():
        inv_d = 1.0 / float(d_model)

        def rmsnorm(val, gamma):
            ms = jnp.sum(val * val, axis=-1, keepdims=True) * inv_d
            return val * jax.lax.rsqrt(ms + _EPS) * gamma

        ctx = acc_sc[...] * pl.reciprocal(l_sc[...], approx=True)      # (H, btq, hdp) f32
        H = ctx.shape[0]
        # single head merge per q-block (amortized over the whole k loop)
        attn_flat = jnp.concatenate([ctx[h] for h in range(H)], axis=-1)   # (btq, H*hdp)
        attn = jnp.dot(attn_flat.astype(bf16), wo_ref[...],
                       preferred_element_type=f32) + bo_ref[...]

        # attn_dropout is identity in eval mode.
        xn = rmsnorm(x_ref[0].astype(f32), g_ai_ref[...])   # recompute norm_attn_in (cheap)
        y = xn + attn                                        # residual around normalized x

        y = rmsnorm(y, g_ao_ref[...])
        y = rmsnorm(y, g_mi_ref[...])

        h1 = jnp.dot(y.astype(bf16), w1_ref[...], preferred_element_type=f32) + b1_ref[...]
        h1 = jax.nn.gelu(h1, approximate=True)
        mlp = jnp.dot(h1.astype(bf16), w2_ref[...], preferred_element_type=f32) + b2_ref[...]

        y = y + mlp
        y = rmsnorm(y, g_mo_ref[...])
        o_ref[0] = y.astype(o_ref.dtype)


# --------------------------------------------------------------------------------------
# One-time parameter preparation (padding to lane-dense, head-divisible widths + bf16 casts).
# --------------------------------------------------------------------------------------
def prepare_params(params, *, num_heads):
    D = params["wq"].shape[0]
    H = num_heads
    assert D % H == 0, "model dim must be divisible by num_heads"
    hd = D // H
    H4 = params["w1"].shape[1]

    lane = 128
    Dp = _round_up(D, lane)
    while Dp % H != 0:
        Dp += lane
    hdp = Dp // H
    Hp = _round_up(H4, lane)

    f32, bf16 = jnp.float32, jnp.bfloat16

    def pad2(a, r, c):
        return jnp.pad(a, ((0, r - a.shape[0]), (0, c - a.shape[1])))

    def pad_qkv_w(w):   # (D,D): head-blocked output columns -> (Dp, H*hdp) == (Dp, Dp)
        w3 = w.reshape(D, H, hd)
        w3 = jnp.pad(w3, ((0, Dp - D), (0, 0), (0, hdp - hd)))
        return w3.reshape(Dp, H * hdp)

    def pad_qkv_b(b):   # (1,D): head-blocked -> (1, Dp)
        b3 = b.reshape(1, H, hd)
        b3 = jnp.pad(b3, ((0, 0), (0, 0), (0, hdp - hd)))
        return b3.reshape(1, H * hdp)

    def pad_o_w(w):     # (D,D): head-blocked input rows -> (H*hdp, Dp) == (Dp, Dp)
        w3 = w.reshape(H, hd, D)
        w3 = jnp.pad(w3, ((0, 0), (0, hdp - hd), (0, Dp - D)))
        return w3.reshape(H * hdp, Dp)

    prep = {
        "wq": pad_qkv_w(params["wq"]).astype(bf16),
        "wk": pad_qkv_w(params["wk"]).astype(bf16),
        "wv": pad_qkv_w(params["wv"]).astype(bf16),
        "wo": pad_o_w(params["wo"]).astype(bf16),
        "bq": pad_qkv_b(params["bq"]).astype(f32),
        "bk": pad_qkv_b(params["bk"]).astype(f32),
        "bv": pad_qkv_b(params["bv"]).astype(f32),
        "bo": pad2(params["bo"], 1, Dp).astype(f32),
        "w1": pad2(params["w1"], Dp, Hp).astype(bf16),
        "b1": pad2(params["b1"], 1, Hp).astype(f32),
        "w2": pad2(params["w2"], Hp, Dp).astype(bf16),
        "b2": pad2(params["b2"], 1, Dp).astype(f32),
        "g_attn_in": pad2(params["g_attn_in"], 1, Dp).astype(f32),
        "g_attn_out": pad2(params["g_attn_out"], 1, Dp).astype(f32),
        "g_mlp_in": pad2(params["g_mlp_in"], 1, Dp).astype(f32),
        "g_mlp_out": pad2(params["g_mlp_out"], 1, Dp).astype(f32),
    }
    meta = {"D": D, "H": H, "hd": hd, "Dp": Dp, "hdp": hdp, "Hp": Hp}
    return prep, meta


# --------------------------------------------------------------------------------------
# Wrapper
# --------------------------------------------------------------------------------------
def _build_and_run(xp, prep, meta, *, t_real, bt, vmem_limit, single_buffer_weights):
    B, Tp, Dp = xp.shape
    D, H, hd, hdp, Hp = meta["D"], meta["H"], meta["hd"], meta["hdp"], meta["Hp"]
    NT = Tp // bt
    f32, bf16 = jnp.float32, jnp.bfloat16

    def const_spec(shape):
        idx = lambda *_: (0,) * len(shape)
        if single_buffer_weights:
            # constant index_map -> double-buffering buys nothing; single-buffer the weights.
            return pl.BlockSpec(shape, idx, pipeline_mode=pl.Buffered(1))
        return pl.BlockSpec(shape, idx)

    # ---- kernel A: RMSNorm + Q/K/V projections (once per token) ----
    qkv_call = pl.pallas_call(
        functools.partial(_qkv_proj_kernel, d_model=D, head_dim=hd),
        out_shape=[jax.ShapeDtypeStruct((B, Tp, Dp), bf16)] * 3,
        grid_spec=pltpu.PrefetchScalarGridSpec(
            num_scalar_prefetch=0,
            grid=(B, NT),
            in_specs=[
                pl.BlockSpec((1, bt, Dp), lambda b, t: (b, t, 0)),      # x block
                const_spec((1, Dp)),                                     # g_attn_in
                const_spec((Dp, Dp)), const_spec((Dp, Dp)), const_spec((Dp, Dp)),  # wq wk wv
                const_spec((1, Dp)), const_spec((1, Dp)), const_spec((1, Dp)),     # bq bk bv
            ],
            out_specs=[pl.BlockSpec((1, bt, Dp), lambda b, t: (b, t, 0)),
                       pl.BlockSpec((1, bt, Dp), lambda b, t: (b, t, 0)),
                       pl.BlockSpec((1, bt, Dp), lambda b, t: (b, t, 0))],
        ),
        compiler_params=pltpu.CompilerParams(
            dimension_semantics=("parallel", "parallel"),
            vmem_limit_bytes=vmem_limit),
    )
    q, k, v = qkv_call(xp, prep["g_attn_in"], prep["wq"], prep["wk"], prep["wv"],
                       prep["bq"], prep["bk"], prep["bv"])

    # head-leading relayout done ONCE in XLA (not per (q-block, k-block) step)
    def to_heads(a):
        return a.reshape(B, Tp, H, hdp).transpose(0, 2, 1, 3)   # (B, H, Tp, hdp)
    qh, kh, vh = to_heads(q), to_heads(k), to_heads(v)

    masked_t = None if Tp == t_real else t_real

    # ---- kernel B: flash attention + output proj + residual + norms + MLP ----
    attn_call = pl.pallas_call(
        functools.partial(_attn_mlp_kernel, d_model=D, t_real=masked_t, block_k=bt),
        out_shape=jax.ShapeDtypeStruct((B, Tp, Dp), xp.dtype),
        grid_spec=pltpu.PrefetchScalarGridSpec(
            num_scalar_prefetch=0,
            grid=(B, NT, NT),
            in_specs=[
                pl.BlockSpec((1, bt, Dp), lambda b, qi, ki: (b, qi, 0)),        # x (residual)
                pl.BlockSpec((1, H, bt, hdp), lambda b, qi, ki: (b, 0, qi, 0)), # q heads
                pl.BlockSpec((1, H, bt, hdp), lambda b, qi, ki: (b, 0, ki, 0)), # k heads
                pl.BlockSpec((1, H, bt, hdp), lambda b, qi, ki: (b, 0, ki, 0)), # v heads
                const_spec((1, Dp)),                                            # g_attn_in
                const_spec((Dp, Dp)), const_spec((1, Dp)),                      # wo bo
                const_spec((Dp, Hp)), const_spec((1, Hp)),                      # w1 b1
                const_spec((Hp, Dp)), const_spec((1, Dp)),                      # w2 b2
                const_spec((1, Dp)), const_spec((1, Dp)), const_spec((1, Dp)),  # g_ao g_mi g_mo
            ],
            out_specs=pl.BlockSpec((1, bt, Dp), lambda b, qi, ki: (b, qi, 0)),
            scratch_shapes=[
                pltpu.VMEM((H, bt, 1), f32),      # m (online-softmax max)
                pltpu.VMEM((H, bt, 1), f32),      # l (online-softmax denom)
                pltpu.VMEM((H, bt, hdp), f32),    # acc
            ],
        ),
        compiler_params=pltpu.CompilerParams(
            dimension_semantics=("parallel", "parallel", "arbitrary"),
            vmem_limit_bytes=vmem_limit),
    )
    return attn_call(xp, qh, kh, vh,
                     prep["g_attn_in"],
                     prep["wo"], prep["bo"],
                     prep["w1"], prep["b1"], prep["w2"], prep["b2"],
                     prep["g_attn_out"], prep["g_mlp_in"], prep["g_mlp_out"])


def encoder_layer_padded(xp, prep, meta, *, t_real, bt, vmem_limit):
    """Forward in the padded (B, Tp, Dp) layout (use this directly when stacking layers)."""
    try:
        return _build_and_run(xp, prep, meta, t_real=t_real, bt=bt,
                              vmem_limit=vmem_limit, single_buffer_weights=True)
    except (TypeError, NotImplementedError, pltpu.LoweringException):
        # Only for builds where pipeline_mode=pl.Buffered(1) is unsupported; genuine
        # shape / VMEM errors are NOT swallowed here (they re-raise from either path).
        return _build_and_run(xp, prep, meta, t_real=t_real, bt=bt,
                              vmem_limit=vmem_limit, single_buffer_weights=False)


def encoder_layer(x, prep, meta, *, block_t=None):
    """Fused EncoderLayer forward. x: (B, T, D) float32."""
    B, T, D = x.shape
    assert D == meta["D"]
    Dp = meta["Dp"]

    vmem_limit, default_block = _device_defaults()
    if block_t is None:
        block_t = default_block
    # sequence block: multiple of 16 (bf16 sublane tile), >= 16
    bt = max(16, _round_up(min(block_t, _round_up(T, 16)), 16))
    Tp = _round_up(T, bt)

    xp = jnp.pad(x, ((0, 0), (0, Tp - T), (0, Dp - D)))
    # TODO(synk): for a stack of layers, keep activations in the padded (B, Tp, Dp) layout and
    #             call encoder_layer_padded directly to avoid the per-layer pad / slice.
    out_p = encoder_layer_padded(xp, prep, meta, t_real=T, bt=bt, vmem_limit=vmem_limit)
    return out_p[:, :T, :D]


# --------------------------------------------------------------------------------------
# Reference (pure JAX).  mirror_bf16=True mimics the kernel's bf16 MXU operands so the
# comparison tolerance can be tight.
# --------------------------------------------------------------------------------------
def encoder_layer_reference(x, params, *, num_heads, mirror_bf16=True):
    B, T, D = x.shape
    H = num_heads
    hd = D // H
    f32, bf16 = jnp.float32, jnp.bfloat16
    c = (lambda a: a.astype(bf16)) if mirror_bf16 else (lambda a: a)

    def mm(a, b):
        return jnp.dot(c(a), c(b), preferred_element_type=f32)

    def rms(v, g):
        ms = jnp.mean(v * v, axis=-1, keepdims=True)
        return v * jax.lax.rsqrt(ms + _EPS) * g

    xn = rms(x, params["g_attn_in"])
    q = (mm(xn, params["wq"]) + params["bq"]) * (1.0 / math.sqrt(hd))
    k = mm(xn, params["wk"]) + params["bk"]
    v = mm(xn, params["wv"]) + params["bv"]
    if mirror_bf16:
        q = q.astype(bf16).astype(f32)
        k = k.astype(bf16).astype(f32)
        v = v.astype(bf16).astype(f32)
    qh = q.reshape(B, T, H, hd).transpose(0, 2, 1, 3)
    kh = k.reshape(B, T, H, hd).transpose(0, 2, 1, 3)
    vh = v.reshape(B, T, H, hd).transpose(0, 2, 1, 3)
    s = jnp.einsum("bhqd,bhkd->bhqk", c(qh), c(kh), preferred_element_type=f32)
    p = jax.nn.softmax(s, axis=-1)
    ctx = jnp.einsum("bhqk,bhkd->bhqd", c(p), c(vh), preferred_element_type=f32)
    ctx = ctx.transpose(0, 2, 1, 3).reshape(B, T, D)
    attn = mm(ctx, params["wo"]) + params["bo"]
    y = xn + attn
    y = rms(y, params["g_attn_out"])
    y = rms(y, params["g_mlp_in"])
    h1 = jax.nn.gelu(mm(y, params["w1"]) + params["b1"], approximate=True)
    m = mm(h1, params["w2"]) + params["b2"]
    y = y + m
    return rms(y, params["g_mlp_out"])


def init_params(key, dim):
    ks = jax.random.split(key, 16)
    H4 = 4 * dim
    s = 1.0 / math.sqrt(dim)
    n = lambda k, shape, sc: jax.random.normal(k, shape, jnp.float32) * sc
    return {
        "wq": n(ks[0], (dim, dim), s), "wk": n(ks[1], (dim, dim), s),
        "wv": n(ks[2], (dim, dim), s), "wo": n(ks[3], (dim, dim), s),
        "bq": n(ks[4], (1, dim), 0.1), "bk": n(ks[5], (1, dim), 0.1),
        "bv": n(ks[6], (1, dim), 0.1), "bo": n(ks[7], (1, dim), 0.1),
        "w1": n(ks[8], (dim, H4), s), "b1": n(ks[9], (1, H4), 0.1),
        "w2": n(ks[10], (H4, dim), 1.0 / math.sqrt(H4)), "b2": n(ks[11], (1, dim), 0.1),
        "g_attn_in": 1.0 + n(ks[12], (1, dim), 0.1),
        "g_attn_out": 1.0 + n(ks[13], (1, dim), 0.1),
        "g_mlp_in": 1.0 + n(ks[14], (1, dim), 0.1),
        "g_mlp_out": 1.0 + n(ks[15], (1, dim), 0.1),
    }


if __name__ == "__main__":
    # small shapes; T=24 with block_t=16 exercises multi-block online softmax AND key masking
    B, T, D, H = 2, 24, 32, 4

    key = jax.random.PRNGKey(0)
    kx, kp = jax.random.split(key)
    x = jax.random.normal(kx, (B, T, D), jnp.float32)
    params = init_params(kp, D)

    prep, meta = prepare_params(params, num_heads=H)   # one-time padding / bf16 casts
    out = encoder_layer(x, prep, meta, block_t=16)
    out = jax.block_until_ready(out)

    assert out.shape == (B, T, D)
    assert bool(jnp.all(jnp.isfinite(out)))

    # bf16-mirrored reference (same cast points as the kernel) -> tight tolerance; the residual
    # difference is the online softmax, approx reciprocal and accumulation-order noise.
    ref = encoder_layer_reference(x, params, num_heads=H, mirror_bf16=True)
    max_err = float(jnp.max(jnp.abs(out - ref)))
    assert max_err < 5e-2, f"max abs error vs bf16-mirrored reference too large: {max_err}"

    print("KERNEL_OK")
</pallas_src>

<mosaic_0001>
module attributes {stable_mosaic.version = 11 : i64} {
  func.func @_qkv_proj_kernel(%arg0: i32, %arg1: i32, %arg2: memref<1x16x128xf32, #tpu.memory_space<vmem>>, %arg3: memref<1x128xf32, #tpu.memory_space<vmem>>, %arg4: memref<128x128xbf16, #tpu.memory_space<vmem>>, %arg5: memref<128x128xbf16, #tpu.memory_space<vmem>>, %arg6: memref<128x128xbf16, #tpu.memory_space<vmem>>, %arg7: memref<1x128xf32, #tpu.memory_space<vmem>>, %arg8: memref<1x128xf32, #tpu.memory_space<vmem>>, %arg9: memref<1x128xf32, #tpu.memory_space<vmem>>, %arg10: memref<1x16x128xbf16, #tpu.memory_space<vmem>>, %arg11: memref<1x16x128xbf16, #tpu.memory_space<vmem>>, %arg12: memref<1x16x128xbf16, #tpu.memory_space<vmem>>) attributes {dimension_semantics = [#tpu.dimension_semantics<parallel>, #tpu.dimension_semantics<parallel>], iteration_bounds = array<i64: 2, 2>, scalar_prefetch = 0 : i64, scratch_operands = 0 : i64, tpu.core_type = #tpu.core_type<tc>, window_params = [{transform_indices = @transform_0, window_bounds = array<i64: 1, 16, 128>}, {pipeline_mode = #tpu.pipeline_mode<synchronous>, transform_indices = @transform_1, window_bounds = array<i64: 1, 128>}, {pipeline_mode = #tpu.pipeline_mode<synchronous>, transform_indices = @transform_2, window_bounds = array<i64: 128, 128>}, {pipeline_mode = #tpu.pipeline_mode<synchronous>, transform_indices = @transform_3, window_bounds = array<i64: 128, 128>}, {pipeline_mode = #tpu.pipeline_mode<synchronous>, transform_indices = @transform_4, window_bounds = array<i64: 128, 128>}, {pipeline_mode = #tpu.pipeline_mode<synchronous>, transform_indices = @transform_5, window_bounds = array<i64: 1, 128>}, {pipeline_mode = #tpu.pipeline_mode<synchronous>, transform_indices = @transform_6, window_bounds = array<i64: 1, 128>}, {pipeline_mode = #tpu.pipeline_mode<synchronous>, transform_indices = @transform_7, window_bounds = array<i64: 1, 128>}, {transform_indices = @transform_8, window_bounds = array<i64: 1, 16, 128>}, {transform_indices = @transform_9, window_bounds = array<i64: 1, 16, 128>}, {transform_indices = @transform_10, window_bounds = array<i64: 1, 16, 128>}]} {
    %c0 = arith.constant 0 : index
    %c0_0 = arith.constant 0 : index
    %c0_1 = arith.constant 0 : index
    %0 = vector.load %arg2[%c0, %c0_0, %c0_1] : memref<1x16x128xf32, #tpu.memory_space<vmem>>, vector<1x16x128xf32>
    %1 = vector.shape_cast %0 : vector<1x16x128xf32> to vector<16x128xf32>
    %2 = arith.mulf %1, %1 : vector<16x128xf32>
    %cst = arith.constant dense<0.000000e+00> : vector<16xf32>
    %3 = vector.multi_reduction <add>, %2, %cst [1] : vector<16x128xf32> to vector<16xf32>
    %4 = vector.shape_cast %3 : vector<16xf32> to vector<16x1xf32>
    %cst_2 = arith.constant 3.125000e-02 : f32
    %5 = vector.broadcast %cst_2 : f32 to vector<16x1xf32>
    %6 = arith.mulf %4, %5 : vector<16x1xf32>
    %cst_3 = arith.constant 9.99999997E-7 : f32
    %7 = vector.broadcast %cst_3 : f32 to vector<16x1xf32>
    %8 = arith.addf %6, %7 : vector<16x1xf32>
    %9 = math.rsqrt %8 : vector<16x1xf32>
    %10 = vector.broadcast %9 : vector<16x1xf32> to vector<16x128xf32>
    %11 = arith.mulf %1, %10 : vector<16x128xf32>
    %c0_4 = arith.constant 0 : index
    %c0_5 = arith.constant 0 : index
    %12 = vector.load %arg3[%c0_4, %c0_5] : memref<1x128xf32, #tpu.memory_space<vmem>>, vector<1x128xf32>
    %13 = vector.broadcast %12 : vector<1x128xf32> to vector<16x128xf32>
    %14 = arith.mulf %11, %13 : vector<16x128xf32>
    %15 = arith.truncf %14 : vector<16x128xf32> to vector<16x128xbf16>
    %c0_6 = arith.constant 0 : index
    %c0_7 = arith.constant 0 : index
    %16 = vector.load %arg4[%c0_6, %c0_7] : memref<128x128xbf16, #tpu.memory_space<vmem>>, vector<128x128xbf16>
    %cst_8 = arith.constant dense<0.000000e+00> : vector<16x128xf32>
    %17 = tpu.matmul %15, %16, %cst_8 {dimension_numbers = #tpu.dot_dimension_numbers<[1], [0], [0], [1], [0, 0, 1, 1], [], []>} : vector<16x128xbf16>, vector<128x128xbf16>, vector<16x128xf32> -> vector<16x128xf32>
    %c0_9 = arith.constant 0 : index
    %c0_10 = arith.constant 0 : index
    %18 = vector.load %arg7[%c0_9, %c0_10] : memref<1x128xf32, #tpu.memory_space<vmem>>, vector<1x128xf32>
    %19 = vector.broadcast %18 : vector<1x128xf32> to vector<16x128xf32>
    %20 = arith.addf %17, %19 : vector<16x128xf32>
    %c0_11 = arith.constant 0 : index
    %c0_12 = arith.constant 0 : index
    %21 = vector.load %arg5[%c0_11, %c0_12] : memref<128x128xbf16, #tpu.memory_space<vmem>>, vector<128x128xbf16>
    %cst_13 = arith.constant dense<0.000000e+00> : vector<16x128xf32>
    %22 = tpu.matmul %15, %21, %cst_13 {dimension_numbers = #tpu.dot_dimension_numbers<[1], [0], [0], [1], [0, 0, 1, 1], [], []>} : vector<16x128xbf16>, vector<128x128xbf16>, vector<16x128xf32> -> vector<16x128xf32>
    %c0_14 = arith.constant 0 : index
    %c0_15 = arith.constant 0 : index
    %23 = vector.load %arg8[%c0_14, %c0_15] : memref<1x128xf32, #tpu.memory_space<vmem>>, vector<1x128xf32>
    %24 = vector.broadcast %23 : vector<1x128xf32> to vector<16x128xf32>
    %25 = arith.addf %22, %24 : vector<16x128xf32>
    %c0_16 = arith.constant 0 : index
    %c0_17 = arith.constant 0 : index
    %26 = vector.load %arg6[%c0_16, %c0_17] : memref<128x128xbf16, #tpu.memory_space<vmem>>, vector<128x128xbf16>
    %cst_18 = arith.constant dense<0.000000e+00> : vector<16x128xf32>
    %27 = tpu.matmul %15, %26, %cst_18 {dimension_numbers = #tpu.dot_dimension_numbers<[1], [0], [0], [1], [0, 0, 1, 1], [], []>} : vector<16x128xbf16>, vector<128x128xbf16>, vector<16x128xf32> -> vector<16x128xf32>
    %c0_19 = arith.constant 0 : index
    %c0_20 = arith.constant 0 : index
    %28 = vector.load %arg9[%c0_19, %c0_20] : memref<1x128xf32, #tpu.memory_space<vmem>>, vector<1x128xf32>
    %29 = vector.broadcast %28 : vector<1x128xf32> to vector<16x128xf32>
    %30 = arith.addf %27, %29 : vector<16x128xf32>
    %cst_21 = arith.constant 0.353553385 : f32
    %31 = vector.broadcast %cst_21 : f32 to vector<16x128xf32>
    %32 = arith.mulf %20, %31 : vector<16x128xf32>
    %33 = arith.truncf %32 : vector<16x128xf32> to vector<16x128xbf16>
    %c0_22 = arith.constant 0 : index
    %c0_23 = arith.constant 0 : index
    %c0_24 = arith.constant 0 : index
    %34 = vector.load %arg10[%c0_22, %c0_23, %c0_24] : memref<1x16x128xbf16, #tpu.memory_space<vmem>>, vector<1x16x128xbf16>
    %35 = vector.shape_cast %34 : vector<1x16x128xbf16> to vector<16x128xbf16>
    %36 = vector.shape_cast %33 : vector<16x128xbf16> to vector<1x16x128xbf16>
    tpu.vector_store %arg10[%c0_22, %c0_23, %c0_24], %36 {strides = array<i32>} : memref<1x16x128xbf16, #tpu.memory_space<vmem>>, vector<1x16x128xbf16>,
    %37 = arith.truncf %25 : vector<16x128xf32> to vector<16x128xbf16>
    %c0_25 = arith.constant 0 : index
    %c0_26 = arith.constant 0 : index
    %c0_27 = arith.constant 0 : index
    %38 = vector.load %arg11[%c0_25, %c0_26, %c0_27] : memref<1x16x128xbf16, #tpu.memory_space<vmem>>, vector<1x16x128xbf16>
    %39 = vector.shape_cast %38 : vector<1x16x128xbf16> to vector<16x128xbf16>
    %40 = vector.shape_cast %37 : vector<16x128xbf16> to vector<1x16x128xbf16>
    tpu.vector_store %arg11[%c0_25, %c0_26, %c0_27], %40 {strides = array<i32>} : memref<1x16x128xbf16, #tpu.memory_space<vmem>>, vector<1x16x128xbf16>,
    %41 = arith.truncf %30 : vector<16x128xf32> to vector<16x128xbf16>
    %c0_28 = arith.constant 0 : index
    %c0_29 = arith.constant 0 : index
    %c0_30 = arith.constant 0 : index
    %42 = vector.load %arg12[%c0_28, %c0_29, %c0_30] : memref<1x16x128xbf16, #tpu.memory_space<vmem>>, vector<1x16x128xbf16>
    %43 = vector.shape_cast %42 : vector<1x16x128xbf16> to vector<16x128xbf16>
    %44 = vector.shape_cast %41 : vector<16x128xbf16> to vector<1x16x128xbf16>
    tpu.vector_store %arg12[%c0_28, %c0_29, %c0_30], %44 {strides = array<i32>} : memref<1x16x128xbf16, #tpu.memory_space<vmem>>, vector<1x16x128xbf16>,
    return
  }
  func.func @transform_0(%arg0: i32, %arg1: i32) -> (i32, i32, i32) {
    %c0_i32 = arith.constant 0 : i32
    %c0_i32_0 = arith.constant 0 : i32
    return %arg0, %arg1, %c0_i32 : i32, i32, i32
  }
  func.func @transform_1(%arg0: i32, %arg1: i32) -> (i32, i32) {
    %c0_i32 = arith.constant 0 : i32
    %c0_i32_0 = arith.constant 0 : i32
    %c0_i32_1 = arith.constant 0 : i32
    return %c0_i32, %c0_i32_0 : i32, i32
  }
  func.func @transform_2(%arg0: i32, %arg1: i32) -> (i32, i32) {
    %c0_i32 = arith.constant 0 : i32
    %c0_i32_0 = arith.constant 0 : i32
    %c0_i32_1 = arith.constant 0 : i32
    return %c0_i32, %c0_i32_0 : i32, i32
  }
  func.func @transform_3(%arg0: i32, %arg1: i32) -> (i32, i32) {
    %c0_i32 = arith.constant 0 : i32
    %c0_i32_0 = arith.constant 0 : i32
    %c0_i32_1 = arith.constant 0 : i32
    return %c0_i32, %c0_i32_0 : i32, i32
  }
  func.func @transform_4(%arg0: i32, %arg1: i32) -> (i32, i32) {
    %c0_i32 = arith.constant 0 : i32
    %c0_i32_0 = arith.constant 0 : i32
    %c0_i32_1 = arith.constant 0 : i32
    return %c0_i32, %c0_i32_0 : i32, i32
  }
  func.func @transform_5(%arg0: i32, %arg1: i32) -> (i32, i32) {
    %c0_i32 = arith.constant 0 : i32
    %c0_i32_0 = arith.constant 0 : i32
    %c0_i32_1 = arith.constant 0 : i32
    return %c0_i32, %c0_i32_0 : i32, i32
  }
  func.func @transform_6(%arg0: i32, %arg1: i32) -> (i32, i32) {
    %c0_i32 = arith.constant 0 : i32
    %c0_i32_0 = arith.constant 0 : i32
    %c0_i32_1 = arith.constant 0 : i32
    return %c0_i32, %c0_i32_0 : i32, i32
  }
  func.func @transform_7(%arg0: i32, %arg1: i32) -> (i32, i32) {
    %c0_i32 = arith.constant 0 : i32
    %c0_i32_0 = arith.constant 0 : i32
    %c0_i32_1 = arith.constant 0 : i32
    return %c0_i32, %c0_i32_0 : i32, i32
  }
  func.func @transform_8(%arg0: i32, %arg1: i32) -> (i32, i32, i32) {
    %c0_i32 = arith.constant 0 : i32
    %c0_i32_0 = arith.constant 0 : i32
    return %arg0, %arg1, %c0_i32 : i32, i32, i32
  }
  func.func @transform_9(%arg0: i32, %arg1: i32) -> (i32, i32, i32) {
    %c0_i32 = arith.constant 0 : i32
    %c0_i32_0 = arith.constant 0 : i32
    return %arg0, %arg1, %c0_i32 : i32, i32, i32
  }
  func.func @transform_10(%arg0: i32, %arg1: i32) -> (i32, i32, i32) {
    %c0_i32 = arith.constant 0 : i32
    %c0_i32_0 = arith.constant 0 : i32
    return %arg0, %arg1, %c0_i32 : i32, i32, i32
  }
}

</mosaic_0001>

<llo_original>
// kernel: tpu_custom_call.1
$region0: #{tpu_custom_call.1}
  #allocation0 [shape = 'u32[]', space=smem, size = 0x4, offset = 0x4, fixed_abs, tag = 'smem constant byte address 0x4 - core index']
  #allocation1 [shape = 'u32[144,128]{1,0:T(1,128)}', space=vmem, size = 0x12000, scoped, tag = 'internal scratch']
  %s0 = inlined_call_operand.hbm [shape: f32[2,32,128], index: 0, kind: input, shape index: {}]
  %s1 = inlined_call_operand.vmem [shape: f32[1,128], index: 1, kind: input, shape index: {}]
  %s2 = inlined_call_operand.hbm [shape: bf16[128,128], index: 2, kind: input, shape index: {}]
  %s3 = inlined_call_operand.hbm [shape: bf16[128,128], index: 3, kind: input, shape index: {}]
  %s4 = inlined_call_operand.hbm [shape: bf16[128,128], index: 4, kind: input, shape index: {}]
  %s5 = inlined_call_operand.vmem [shape: f32[1,128], index: 5, kind: input, shape index: {}]
  %s6 = inlined_call_operand.vmem [shape: f32[1,128], index: 6, kind: input, shape index: {}]
  %s7 = inlined_call_operand.vmem [shape: f32[1,128], index: 7, kind: input, shape index: {}]
  %s8 = inlined_call_operand.hbm [shape: bf16[2,32,128], index: 8, kind: output, shape index: {0}]
  %s9 = inlined_call_operand.hbm [shape: bf16[2,32,128], index: 9, kind: output, shape index: {1}]
  %s10 = inlined_call_operand.hbm [shape: bf16[2,32,128], index: 10, kind: output, shape index: {2}]
  %11 = xla_tuple %s8, %s9, %s10
  %s12 = sld [smem:[#allocation0]]
  $region97: #{tpu_custom_call.1} parent=0
    _
  %s14 = ssub.s32 1, %s12
  %s15 = scalar_select 0, %s14, %s12
  $region1: #{tpu_custom_call.1} parent=0
    #allocation2 [shape = 'u8[16384]{0}', space=vmem, size = 0x4000, scoped, tag = 'input window, operand 0']
    #allocation3 [shape = 's32[2]{0}', space=sflag, size = 0x8, scoped, tag = 'scoped memory for tpu_custom_call.1']
    #allocation4 [shape = 's32[2]{0}', space=sflag, size = 0x8, scoped, tag = 'scoped memory for tpu_custom_call.1']
    #allocation5 [shape = 'u8[32768]{0}', space=vmem, size = 0x8000, scoped, tag = 'input window, operand 2, single buffered']
    #allocation6 [shape = 's32[1]{0}', space=sflag, size = 0x4, scoped, tag = 'scoped memory for tpu_custom_call.1']
    #allocation7 [shape = 'u8[32768]{0}', space=vmem, size = 0x8000, scoped, tag = 'input window, operand 3, single buffered']
    #allocation8 [shape = 'u8[32768]{0}', space=vmem, size = 0x8000, scoped, tag = 'input window, operand 4, single buffered']
    #allocation9 [shape = 's32[1]{0}', space=sflag, size = 0x4, scoped, tag = 'scoped memory for tpu_custom_call.1']
    #allocation10 [shape = 'u8[8192]{0}', space=vmem, size = 0x2000, scoped, tag = 'output window, operand 0']
    #allocation11 [shape = 'u8[8192]{0}', space=vmem, size = 0x2000, scoped, tag = 'output window, operand 1']
    #allocation12 [shape = 's32[2]{0}', space=sflag, size = 0x8, scoped, tag = 'scoped memory for tpu_custom_call.1']
    #allocation13 [shape = 'u8[8192]{0}', space=vmem, size = 0x2000, scoped, tag = 'output window, operand 2']
    %16 = vsyncpa [#allocation3], 0
    %s17 = scalar_lea.sflag [#allocation3], 1
    %18 = vsyncpa %s17, 0
    %19 = vsyncpa [#allocation6], 0
    %20 = vsyncpa [#allocation9], 0
    %21 = vsyncpa [#allocation4], 0
    %s22 = scalar_lea.sflag [#allocation4], 1
    %23 = vsyncpa %s22, 0
    %24 = vsyncpa [#allocation12], 0
    %s25 = scalar_lea.sflag [#allocation12], 1
    %26 = vsyncpa %s25, 0
    loop: start=0, step=1, limit=6
    $region2: #{tpu_custom_call.1} parent=1 // loop_pre_header
      _
    $region3: #{tpu_custom_call.1} parent=1 // loop_header
      %s28 = sphi 0, %s32
      %p29 = scmp.ge.s32.totalorder %s28, 6
      %s35 = sphi 0, %s47
      %s36 = sphi 0, %s43
      %s37 = sphi 0, %s35
      %s38 = sphi 0, %s36
      %s39 = sphi 0, %s37
      %s40 = sphi 0, %s38
      %s52 = sphi 0, %s54
      %s55 = sphi 0, %s52
      %s56 = sphi 0, %s55
      %s72 = sphi 0, %s56
      %s76 = sphi 0, %s76
      %s78 = sphi 0, %s76
      %s79 = sphi 0, %s78
      %s93 = sphi 0, %s79
      %s97 = sphi 0, %s97
      %s99 = sphi 0, %s97
      %s100 = sphi 0, %s99
      %s114 = sphi 0, %s100
      %s118 = sphi 0, %s118
      %s120 = sphi 0, %s118
      %s121 = sphi 0, %s120
      %s135 = sphi 0, %s121
      %s139 = sphi 0, %s139
      %s141 = sphi 0, %s139
      %s142 = sphi 0, %s141
      %s156 = sphi 0, %s142
      %s160 = sphi 0, %s160
      %s162 = sphi 0, %s160
      %s163 = sphi 0, %s162
      %s177 = sphi 0, %s163
      %s181 = sphi 0, %s181
      %s183 = sphi 0, %s181
      %s184 = sphi 0, %s183
      %s198 = sphi 0, %s184
      %s202 = sphi 0, %s202
      %s204 = sphi 0, %s202
      %s205 = sphi 0, %s204
      %s219 = sphi 0, %s205
      %s227 = sphi 0, %s229
      %s230 = sphi 0, %s227
      %s231 = sphi 0, %s230
      %s247 = sphi 0, %s231
      %s255 = sphi 0, %s257
      %s258 = sphi 0, %s255
      %s259 = sphi 0, %s258
      %s275 = sphi 0, %s259
      %s283 = sphi 0, %s285
      %s286 = sphi 0, %s283
      %s287 = sphi 0, %s286
      %s303 = sphi 0, %s287
    $region4: #{tpu_custom_call.1} parent=1 // loop_header_branch
      %31 = sbr.rel (%p29) target = $region8
    $region5: #{tpu_custom_call.1} parent=1 // loop_body
      %s33 = ssub.s32 %s28, 1
      %s34 = ssub.s32 %s28, 2
      %s41 = sadd.s32 1, %s36
      %p42 = scmp.ge.s32.totalorder %s41, 2
      %s43 = scalar_select %p42, 0, %s41
      %s44 = sadd.s32 1, %s35
      %s45 = scalar_select %p42, %s44, %s35
      %p46 = scmp.ge.s32.totalorder %s45, 2
      %s47 = scalar_select %p46, 0, %s45
      %s48 = ssub.s32 %s35, %s47
      %s49 = ssub.s32 %s36, %s43
      %s50 = sor.u32 %s48, %s49
      %p51 = scmp.eq.s32.totalorder %s50, 0
      %s53 = sadd.s32 %s52, 1
      %s54 = scalar_select %p51, %s52, %s53
      %p57 = pneg %p51
      %p58 = scmp.eq.s32.totalorder %s28, 3
      %p59 = por %p57, %p58
      %p60 = scmp.ne.s32.totalorder %s52, %s55
      %p61 = scmp.eq.s32.totalorder %s28, 0
      %p62 = por %p60, %p61
      %p63 = scmp.ne.s32.totalorder %s52, %s55
      %p64 = scmp.eq.s32.totalorder %s33, 3
      %p65 = por %p63, %p64
      %p66 = scmp.ne.s32.totalorder %s55, %s56
      %p67 = scmp.eq.s32.totalorder %s33, 0
      %p68 = por %p66, %p67
      %p69 = scmp.ne.s32.totalorder %s55, %s56
      %p70 = scmp.eq.s32.totalorder %s34, 3
      %p71 = por %p69, %p70
      %p73 = scmp.ne.s32.totalorder %s56, %s72
      %p74 = scmp.eq.s32.totalorder %s34, 0
      %p75 = por %p73, %p74
      %s77 = sadd.s32 %s76, 1
      %p80 = scmp.eq.s32.totalorder %s28, 3
      %p81 = scmp.ne.s32.totalorder %s76, %s78
      %p82 = scmp.eq.s32.totalorder %s28, 0
      %p83 = por %p81, %p82
      %p84 = scmp.ne.s32.totalorder %s76, %s78
      %p85 = scmp.eq.s32.totalorder %s33, 3
      %p86 = por %p84, %p85
      %p87 = scmp.ne.s32.totalorder %s78, %s79
      %p88 = scmp.eq.s32.totalorder %s33, 0
      %p89 = por %p87, %p88
      %p90 = scmp.ne.s32.totalorder %s78, %s79
      %p91 = scmp.eq.s32.totalorder %s34, 3
      %p92 = por %p90, %p91
      %p94 = scmp.ne.s32.totalorder %s79, %s93
      %p95 = scmp.eq.s32.totalorder %s34, 0
      %p96 = por %p94, %p95
      %s98 = sadd.s32 %s97, 1
      %p101 = scmp.eq.s32.totalorder %s28, 3
      %p102 = scmp.ne.s32.totalorder %s97, %s99
      %p103 = scmp.eq.s32.totalorder %s28, 0
      %p104 = por %p102, %p103
      %p105 = scmp.ne.s32.totalorder %s97, %s99
      %p106 = scmp.eq.s32.totalorder %s33, 3
      %p107 = por %p105, %p106
      %p108 = scmp.ne.s32.totalorder %s99, %s100
      %p109 = scmp.eq.s32.totalorder %s33, 0
      %p110 = por %p108, %p109
      %p111 = scmp.ne.s32.totalorder %s99, %s100
      %p112 = scmp.eq.s32.totalorder %s34, 3
      %p113 = por %p111, %p112
      %p115 = scmp.ne.s32.totalorder %s100, %s114
      %p116 = scmp.eq.s32.totalorder %s34, 0
      %p117 = por %p115, %p116
      %s119 = sadd.s32 %s118, 1
      %p122 = scmp.eq.s32.totalorder %s28, 3
      %p123 = scmp.ne.s32.totalorder %s118, %s120
      %p124 = scmp.eq.s32.totalorder %s28, 0
      %p125 = por %p123, %p124
      %p126 = scmp.ne.s32.totalorder %s118, %s120
      %p127 = scmp.eq.s32.totalorder %s33, 3
      %p128 = por %p126, %p127
      %p129 = scmp.ne.s32.totalorder %s120, %s121
      %p130 = scmp.eq.s32.totalorder %s33, 0
      %p131 = por %p129, %p130
      %p132 = scmp.ne.s32.totalorder %s120, %s121
      %p133 = scmp.eq.s32.totalorder %s34, 3
      %p134 = por %p132, %p133
      %p136 = scmp.ne.s32.totalorder %s121, %s135
      %p137 = scmp.eq.s32.totalorder %s34, 0
      %p138 = por %p136, %p137
      %s140 = sadd.s32 %s139, 1
      %p143 = scmp.eq.s32.totalorder %s28, 3
      %p144 = scmp.ne.s32.totalorder %s139, %s141
      %p145 = scmp.eq.s32.totalorder %s28, 0
      %p146 = por %p144, %p145
      %p147 = scmp.ne.s32.totalorder %s139, %s141
      %p148 = scmp.eq.s32.totalorder %s33, 3
      %p149 = por %p147, %p148
      %p150 = scmp.ne.s32.totalorder %s141, %s142
      %p151 = scmp.eq.s32.totalorder %s33, 0
      %p152 = por %p150, %p151
      %p153 = scmp.ne.s32.totalorder %s141, %s142
      %p154 = scmp.eq.s32.totalorder %s34, 3
      %p155 = por %p153, %p154
      %p157 = scmp.ne.s32.totalorder %s142, %s156
      %p158 = scmp.eq.s32.totalorder %s34, 0
      %p159 = por %p157, %p158
      %s161 = sadd.s32 %s160, 1
      %p164 = scmp.eq.s32.totalorder %s28, 3
      %p165 = scmp.ne.s32.totalorder %s160, %s162
      %p166 = scmp.eq.s32.totalorder %s28, 0
      %p167 = por %p165, %p166
      %p168 = scmp.ne.s32.totalorder %s160, %s162
      %p169 = scmp.eq.s32.totalorder %s33, 3
      %p170 = por %p168, %p169
      %p171 = scmp.ne.s32.totalorder %s162, %s163
      %p172 = scmp.eq.s32.totalorder %s33, 0
      %p173 = por %p171, %p172
      %p174 = scmp.ne.s32.totalorder %s162, %s163
      %p175 = scmp.eq.s32.totalorder %s34, 3
      %p176 = por %p174, %p175
      %p178 = scmp.ne.s32.totalorder %s163, %s177
      %p179 = scmp.eq.s32.totalorder %s34, 0
      %p180 = por %p178, %p179
      %s182 = sadd.s32 %s181, 1
      %p185 = scmp.eq.s32.totalorder %s28, 3
      %p186 = scmp.ne.s32.totalorder %s181, %s183
      %p187 = scmp.eq.s32.totalorder %s28, 0
      %p188 = por %p186, %p187
      %p189 = scmp.ne.s32.totalorder %s181, %s183
      %p190 = scmp.eq.s32.totalorder %s33, 3
      %p191 = por %p189, %p190
      %p192 = scmp.ne.s32.totalorder %s183, %s184
      %p193 = scmp.eq.s32.totalorder %s33, 0
      %p194 = por %p192, %p193
      %p195 = scmp.ne.s32.totalorder %s183, %s184
      %p196 = scmp.eq.s32.totalorder %s34, 3
      %p197 = por %p195, %p196
      %p199 = scmp.ne.s32.totalorder %s184, %s198
      %p200 = scmp.eq.s32.totalorder %s34, 0
      %p201 = por %p199, %p200
      %s203 = sadd.s32 %s202, 1
      %p206 = scmp.eq.s32.totalorder %s28, 3
      %p207 = scmp.ne.s32.totalorder %s202, %s204
      %p208 = scmp.eq.s32.totalorder %s28, 0
      %p209 = por %p207, %p208
      %p210 = scmp.ne.s32.totalorder %s202, %s204
      %p211 = scmp.eq.s32.totalorder %s33, 3
      %p212 = por %p210, %p211
      %p213 = scmp.ne.s32.totalorder %s204, %s205
      %p214 = scmp.eq.s32.totalorder %s33, 0
      %p215 = por %p213, %p214
      %p216 = scmp.ne.s32.totalorder %s204, %s205
      %p217 = scmp.eq.s32.totalorder %s34, 3
      %p218 = por %p216, %p217
      %p220 = scmp.ne.s32.totalorder %s205, %s219
      %p221 = scmp.eq.s32.totalorder %s34, 0
      %p222 = por %p220, %p221
      %s223 = ssub.s32 %s35, %s47
      %s224 = ssub.s32 %s36, %s43
      %s225 = sor.u32 %s223, %s224
      %p226 = scmp.eq.s32.totalorder %s225, 0
      %s228 = sadd.s32 %s227, 1
      %s229 = scalar_select %p226, %s227, %s228
      %p232 = pneg %p226
      %p233 = scmp.eq.s32.totalorder %s28, 3
      %p234 = por %p232, %p233
      %p235 = scmp.ne.s32.totalorder %s227, %s230
      %p236 = scmp.eq.s32.totalorder %s28, 0
      %p237 = por %p235, %p236
      %p238 = scmp.ne.s32.totalorder %s227, %s230
      %p239 = scmp.eq.s32.totalorder %s33, 3
      %p240 = por %p238, %p239
      %p241 = scmp.ne.s32.totalorder %s230, %s231
      %p242 = scmp.eq.s32.totalorder %s33, 0
      %p243 = por %p241, %p242
      %p244 = scmp.ne.s32.totalorder %s230, %s231
      %p245 = scmp.eq.s32.totalorder %s34, 3
      %p246 = por %p244, %p245
      %p248 = scmp.ne.s32.totalorder %s231, %s247
      %p249 = scmp.eq.s32.totalorder %s34, 0
      %p250 = por %p248, %p249
      %s251 = ssub.s32 %s35, %s47
      %s252 = ssub.s32 %s36, %s43
      %s253 = sor.u32 %s251, %s252
      %p254 = scmp.eq.s32.totalorder %s253, 0
      %s256 = sadd.s32 %s255, 1
      %s257 = scalar_select %p254, %s255, %s256
      %p260 = pneg %p254
      %p261 = scmp.eq.s32.totalorder %s28, 3
      %p262 = por %p260, %p261
      %p263 = scmp.ne.s32.totalorder %s255, %s258
      %p264 = scmp.eq.s32.totalorder %s28, 0
      %p265 = por %p263, %p264
      %p266 = scmp.ne.s32.totalorder %s255, %s258
      %p267 = scmp.eq.s32.totalorder %s33, 3
      %p268 = por %p266, %p267
      %p269 = scmp.ne.s32.totalorder %s258, %s259
      %p270 = scmp.eq.s32.totalorder %s33, 0
      %p271 = por %p269, %p270
      %p272 = scmp.ne.s32.totalorder %s258, %s259
      %p273 = scmp.eq.s32.totalorder %s34, 3
      %p274 = por %p272, %p273
      %p276 = scmp.ne.s32.totalorder %s259, %s275
      %p277 = scmp.eq.s32.totalorder %s34, 0
      %p278 = por %p276, %p277
      %s279 = ssub.s32 %s35, %s47
      %s280 = ssub.s32 %s36, %s43
      %s281 = sor.u32 %s279, %s280
      %p282 = scmp.eq.s32.totalorder %s281, 0
      %s284 = sadd.s32 %s283, 1
      %s285 = scalar_select %p282, %s283, %s284
      %p288 = pneg %p282
      %p289 = scmp.eq.s32.totalorder %s28, 3
      %p290 = por %p288, %p289
      %p291 = scmp.ne.s32.totalorder %s283, %s286
      %p292 = scmp.eq.s32.totalorder %s28, 0
      %p293 = por %p291, %p292
      %p294 = scmp.ne.s32.totalorder %s283, %s286
      %p295 = scmp.eq.s32.totalorder %s33, 3
      %p296 = por %p294, %p295
      %p297 = scmp.ne.s32.totalorder %s286, %s287
      %p298 = scmp.eq.s32.totalorder %s33, 0
      %p299 = por %p297, %p298
      %p300 = scmp.ne.s32.totalorder %s286, %s287
      %p301 = scmp.eq.s32.totalorder %s34, 3
      %p302 = por %p300, %p301
      %p304 = scmp.ne.s32.totalorder %s287, %s303
      %p305 = scmp.eq.s32.totalorder %s34, 0
      %p306 = por %p304, %p305
      %p307 = scmp.le.s32.totalorder 1, %s28
      %p308 = scmp.lt.s32.totalorder %s28, 5
      %p309 = pnand %p307, %p308
      %p310 = pneg %p309
      // Predicated region
      $region9: #{tpu_custom_call.1} parent=5 // pred_check
        _
      $region10: #{tpu_custom_call.1} parent=5 // pred_check_branch
        %312 = sbr.rel (%p309) target = $region12
      $region11: #{tpu_custom_call.1} parent=5 // pred_region
        %s313 = ssub.s32 %s28, 1
        // Predicated region
        $region13: #{tpu_custom_call.1} parent=11 // pred_check
          %p314 = pneg %p89
        $region14: #{tpu_custom_call.1} parent=11 // pred_check_branch
          %316 = sbr.rel (%p314) target = $region16
        $region15: #{tpu_custom_call.1} parent=11 // pred_region
          _
        $region16: #{tpu_custom_call.1} parent=11 // pred_fallthru
          _
        // Predicated region
        $region17: #{tpu_custom_call.1} parent=11 // pred_check
          %p317 = pneg %p110
        $region18: #{tpu_custom_call.1} parent=11 // pred_check_branch
          %319 = sbr.rel (%p317) target = $region20
        $region19: #{tpu_custom_call.1} parent=11 // pred_region
          %s321 = ssub.s32 1024, 1024
          %322 = vsyncadd [#allocation6], %s321
          %s323 = sshll.u32 [#allocation5], 4
          %s324 = int_to_ptr.vmem [resolvable:$true] %s323
          %329 = dma.hbm_to_vmem [thread:$0]  %s2, 1024, %s324, [#allocation6], 64, 64, 4
        $region20: #{tpu_custom_call.1} parent=11 // pred_fallthru
          _
        // Predicated region
        $region21: #{tpu_custom_call.1} parent=11 // pred_check
          %p330 = pneg %p131
        $region22: #{tpu_custom_call.1} parent=11 // pred_check_branch
          %332 = sbr.rel (%p330) target = $region24
        $region23: #{tpu_custom_call.1} parent=11 // pred_region
          %s334 = ssub.s32 1024, 1024
          %335 = vsyncadd [#allocation6], %s334
          %s336 = sshll.u32 [#allocation7], 4
          %s337 = int_to_ptr.vmem [resolvable:$true] %s336
          %342 = dma.hbm_to_vmem [thread:$0]  %s3, 1024, %s337, [#allocation6], 64, 64, 4
        $region24: #{tpu_custom_call.1} parent=11 // pred_fallthru
          _
        // Predicated region
        $region25: #{tpu_custom_call.1} parent=11 // pred_check
          %p343 = pneg %p152
        $region26: #{tpu_custom_call.1} parent=11 // pred_check_branch
          %345 = sbr.rel (%p343) target = $region28
        $region27: #{tpu_custom_call.1} parent=11 // pred_region
          %s347 = ssub.s32 1024, 1024
          %348 = vsyncadd [#allocation9], %s347
          %s349 = sshll.u32 [#allocation8], 4
          %s350 = int_to_ptr.vmem [resolvable:$true] %s349
          %355 = dma.hbm_to_vmem [thread:$0]  %s4, 1024, %s350, [#allocation9], 64, 64, 4
        $region28: #{tpu_custom_call.1} parent=11 // pred_fallthru
          _
        // Predicated region
        $region29: #{tpu_custom_call.1} parent=11 // pred_check
          %p356 = pneg %p173
        $region30: #{tpu_custom_call.1} parent=11 // pred_check_branch
          %358 = sbr.rel (%p356) target = $region32
        $region31: #{tpu_custom_call.1} parent=11 // pred_region
          _
        $region32: #{tpu_custom_call.1} parent=11 // pred_fallthru
          _
        // Predicated region
        $region33: #{tpu_custom_call.1} parent=11 // pred_check
          %p359 = pneg %p194
        $region34: #{tpu_custom_call.1} parent=11 // pred_check_branch
          %361 = sbr.rel (%p359) target = $region36
        $region35: #{tpu_custom_call.1} parent=11 // pred_region
          _
        $region36: #{tpu_custom_call.1} parent=11 // pred_fallthru
          _
        // Predicated region
        $region37: #{tpu_custom_call.1} parent=11 // pred_check
          %p362 = pneg %p215
        $region38: #{tpu_custom_call.1} parent=11 // pred_check_branch
          %364 = sbr.rel (%p362) target = $region40
        $region39: #{tpu_custom_call.1} parent=11 // pred_region
          _
        $region40: #{tpu_custom_call.1} parent=11 // pred_fallthru
          _
      $region12: #{tpu_custom_call.1} parent=5 // pred_fallthru
        _
      %p365 = scmp.lt.s32.totalorder %s28, 4
      // Predicated region
      $region41: #{tpu_custom_call.1} parent=5 // pred_check
        %p366 = pneg %p365
      $region42: #{tpu_custom_call.1} parent=5 // pred_check_branch
        %368 = sbr.rel (%p366) target = $region44
      $region43: #{tpu_custom_call.1} parent=5 // pred_region
        // Predicated region
        $region45: #{tpu_custom_call.1} parent=43 // pred_check
          %p369 = pneg %p62
        $region46: #{tpu_custom_call.1} parent=43 // pred_check_branch
          %371 = sbr.rel (%p369) target = $region48
        $region47: #{tpu_custom_call.1} parent=43 // pred_region
          %s372 = sand.u32 %s52, 1
          %s373 = scalar_lea.sflag [#allocation3], %s372
          %s374 = sand.u32 %s52, 1
          %s375 = smul.addr %s374, 16
          %s376 = scalar_lea.vmem [#allocation2], %s375
          %s377 = smul.u32 2, %s36
          %s379 = ssub.s32 256, 256
          %380 = vsyncadd %s373, %s379
          %s381 = smul.addr %s35, 4
          %s382 = sadd.s32 %s377, %s381
          %s383 = smul.addr %s382, 128
          %s384 = scalar_lea.hbm %s0, %s383
          %s385 = sshll.u32 %s376, 4
          %s386 = int_to_ptr.vmem [resolvable:$true] %s385
          %391 = dma.hbm_to_vmem [thread:$0]  %s384, 256, %s386, %s373, 128, 128, 8
        $region48: #{tpu_custom_call.1} parent=43 // pred_fallthru
          _
      $region44: #{tpu_custom_call.1} parent=5 // pred_fallthru
        _
      %p392 = scmp.le.s32.totalorder 1, %s28
      %p393 = scmp.lt.s32.totalorder %s28, 5
      %p394 = pnand %p392, %p393
      %p395 = pneg %p394
      // Predicated region
      $region49: #{tpu_custom_call.1} parent=5 // pred_check
        _
      $region50: #{tpu_custom_call.1} parent=5 // pred_check_branch
        %397 = sbr.rel (%p394) target = $region52
      $region51: #{tpu_custom_call.1} parent=5 // pred_region
        %s398 = ssub.s32 %s28, 1
        %s399 = sand.u32 %s55, 1
        %s400 = scalar_lea.sflag [#allocation3], %s399
        %s401 = sand.u32 %s55, 1
        %s402 = smul.addr %s401, 16
        %s403 = scalar_lea.vmem [#allocation2], %s402
        // Predicated region
        $region53: #{tpu_custom_call.1} parent=51 // pred_check
          %p404 = pneg %p68
        $region54: #{tpu_custom_call.1} parent=51 // pred_check_branch
          %406 = sbr.rel (%p404) target = $region56
        $region55: #{tpu_custom_call.1} parent=51 // pred_region
          %407 = dma.done %s400, 256
        $region56: #{tpu_custom_call.1} parent=51 // pred_fallthru
          _
        // Predicated region
        $region57: #{tpu_custom_call.1} parent=51 // pred_check
          %p408 = pneg %p110
        $region58: #{tpu_custom_call.1} parent=51 // pred_check_branch
          %410 = sbr.rel (%p408) target = $region60
        $region59: #{tpu_custom_call.1} parent=51 // pred_region
          %411 = dma.done [#allocation6], 1024
        $region60: #{tpu_custom_call.1} parent=51 // pred_fallthru
          _
        // Predicated region
        $region61: #{tpu_custom_call.1} parent=51 // pred_check
          %p412 = pneg %p131
        $region62: #{tpu_custom_call.1} parent=51 // pred_check_branch
          %414 = sbr.rel (%p412) target = $region64
        $region63: #{tpu_custom_call.1} parent=51 // pred_region
          %415 = dma.done [#allocation6], 1024
        $region64: #{tpu_custom_call.1} parent=51 // pred_fallthru
          _
        // Predicated region
        $region65: #{tpu_custom_call.1} parent=51 // pred_check
          %p416 = pneg %p152
        $region66: #{tpu_custom_call.1} parent=51 // pred_check_branch
          %418 = sbr.rel (%p416) target = $region68
        $region67: #{tpu_custom_call.1} parent=51 // pred_region
          %419 = dma.done [#allocation9], 1024
        $region68: #{tpu_custom_call.1} parent=51 // pred_fallthru
          _
        %s420 = sand.u32 %s55, 1
        %s421 = scalar_lea.sflag [#allocation3], %s420
        %s422 = sand.u32 %s55, 1
        %s423 = smul.addr %s422, 16
        %s424 = scalar_lea.vmem [#allocation2], %s423
        %p425 = pneg %p68
        %p426 = pneg %p65
        %p427 = pneg %p89
        %p428 = pneg %p86
        %p429 = pneg %p110
        %p430 = pneg %p107
        %p431 = pneg %p131
        %p432 = pneg %p128
        %p433 = pneg %p152
        %p434 = pneg %p149
        %p435 = pneg %p173
        %p436 = pneg %p170
        %p437 = pneg %p194
        %p438 = pneg %p191
        %p439 = pneg %p215
        %p440 = pneg %p212
        %p441 = pneg %p243
        %p442 = pneg %p240
        %s443 = sand.u32 %s230, 1
        %s444 = scalar_lea.sflag [#allocation4], %s443
        %s445 = sand.u32 %s230, 1
        %s446 = smul.addr %s445, 8
        %s447 = scalar_lea.vmem [#allocation10], %s446
        %p448 = pneg %p271
        %p449 = pneg %p268
        %s450 = sand.u32 %s33, 1
        %s451 = scalar_lea.sflag [#allocation12], %s450
        %s452 = sand.u32 %s258, 1
        %s453 = smul.addr %s452, 8
        %s454 = scalar_lea.vmem [#allocation11], %s453
        %p455 = pneg %p299
        %p456 = pneg %p296
        %s457 = sand.u32 %s33, 1
        %s458 = scalar_lea.sflag [#allocation12], %s457
        %s459 = sand.u32 %s286, 1
        %s460 = smul.addr %s459, 8
        %s461 = scalar_lea.vmem [#allocation13], %s460
        %s462 = smul.u32 2, %s38
        %s463 = smul.u32 2, %s38
        %s464 = smul.u32 2, %s38
        %s465 = smul.u32 2, %s38
        %v467 = vld [vmem:[%s403] sm:$0xff]
        %v468 = vld [vmem:[%s403 + $0x8] sm:$0xff]
        %v469 = vmul.f32 %v467, %v467
        %v470 = vmul.f32 %v468, %v468
        %471 = vadd.xlane.f32.xlu0 %v469
        %v472 = vpop.xlane.xlu0 %471
        %473 = vadd.xlane.f32.xlu0 %v470
        %v474 = vpop.xlane.xlu0 %473
        %v475 = vmul.f32 %v472, 0.03125
        %v476 = vmul.f32 %v474, 0.03125
        %v477 = vadd.f32 %v475, 1e-06
        %v478 = vadd.f32 %v476, 1e-06
        %v479 = vrsqrt.pop %v477
        %v480 = vrsqrt.pop %v478
        %v481 = vmul.f32 %v467, %v479
        %v482 = vmul.f32 %v468, %v480
        %v483 = vld [vmem:[%s1] sm:$0x1]
        %v485 = vlaneseq
        %v486 = vshrl.u32 %v485, 7
        %v487 = vsub.s32 0, %v486
        %v488 = vrot.slane %v483, %v487
        %v490 = vmul.f32 %v481, %v488
        %v491 = vmul.f32 %v482, %v488
        %v492 = vpack.c.bf16 %v491, %v490
        %v493 = vld [vmem:[#allocation5] sm:$0xf]
        %v494 = vld [vmem:[#allocation5 + $0x4] sm:$0xf]
        %v495 = vld [vmem:[#allocation5 + $0x8] sm:$0xf]
        %v496 = vld [vmem:[#allocation5 + $0xc] sm:$0xf]
        %v497 = vld [vmem:[#allocation5 + $0x10] sm:$0xf]
        %v498 = vld [vmem:[#allocation5 + $0x14] sm:$0xf]
        %v499 = vld [vmem:[#allocation5 + $0x18] sm:$0xf]
        %v500 = vld [vmem:[#allocation5 + $0x1c] sm:$0xf]
        %v501 = vld [vmem:[#allocation5 + $0x20] sm:$0xf]
        %v502 = vld [vmem:[#allocation5 + $0x24] sm:$0xf]
        %v503 = vld [vmem:[#allocation5 + $0x28] sm:$0xf]
        %v504 = vld [vmem:[#allocation5 + $0x2c] sm:$0xf]
        %v505 = vld [vmem:[#allocation5 + $0x30] sm:$0xf]
        %v506 = vld [vmem:[#allocation5 + $0x34] sm:$0xf]
        %v507 = vld [vmem:[#allocation5 + $0x38] sm:$0xf]
        %v508 = vld [vmem:[#allocation5 + $0x3c] sm:$0xf]
        %v509 = vld [vmem:[%s5] sm:$0x1]
        %v511 = vlaneseq
        %v512 = vshrl.u32 %v511, 7
        %v513 = vsub.s32 0, %v512
        %v514 = vrot.slane %v509, %v513
        %v532 = vunpack.c.l.b16 %v493
        %v533 = vunpack.c.l.b16 %v494
        %v534 = vunpack.c.l.b16 %v495
        %v535 = vunpack.c.l.b16 %v496
        %v536 = vunpack.c.l.b16 %v497
        %v537 = vunpack.c.l.b16 %v498
        %v538 = vunpack.c.l.b16 %v499
        %v539 = vunpack.c.l.b16 %v500
        %v540 = vunpack.c.l.b16 %v501
        %v541 = vunpack.c.l.b16 %v502
        %v542 = vunpack.c.l.b16 %v503
        %v543 = vunpack.c.l.b16 %v504
        %v544 = vunpack.c.l.b16 %v505
        %v545 = vunpack.c.l.b16 %v506
        %v546 = vunpack.c.l.b16 %v507
        %v547 = vunpack.c.l.b16 %v508
        %v548 = vpack.c.b16 %v533, %v532
        %v549 = vpack.c.b16 %v535, %v534
        %v550 = vpack.c.b16 %v537, %v536
        %v551 = vpack.c.b16 %v539, %v538
        %v552 = vpack.c.b16 %v541, %v540
        %v553 = vpack.c.b16 %v543, %v542
        %v554 = vpack.c.b16 %v545, %v544
        %v555 = vpack.c.b16 %v547, %v546
        %564 = vmatprep.subr.bf16.mxu0 0
        %565 = vmatpush1.bf16.msra.mxu0 %v548
        %566 = vmatprep.subr.bf16.mxu0 0
        %567 = vmatpush1.bf16.msra.mxu0 %v549
        %568 = vmatprep.subr.bf16.mxu0 0
        %569 = vmatpush1.bf16.msra.mxu0 %v550
        %570 = vmatprep.subr.bf16.mxu0 0
        %571 = vmatpush1.bf16.msra.mxu0 %v551
        %572 = vmatprep.subr.bf16.mxu0 0
        %573 = vmatpush1.bf16.msra.mxu0 %v552
        %574 = vmatprep.subr.bf16.mxu0 0
        %575 = vmatpush1.bf16.msra.mxu0 %v553
        %576 = vmatprep.subr.bf16.mxu0 0
        %577 = vmatpush1.bf16.msra.mxu0 %v554
        %578 = vmatprep.subr.bf16.mxu0 0
        %579 = vmatpush1.bf16.msra.mxu0 %v555
        %580 = vmatprep.subr.bf16.mxu0 0
        %581 = vmatpush1.bf16.msra.mxu0 0
        %582 = vmatprep.subr.bf16.mxu0 0
        %583 = vmatpush1.bf16.msra.mxu0 0
        %584 = vmatprep.subr.bf16.mxu0 0
        %585 = vmatpush1.bf16.msra.mxu0 0
        %586 = vmatprep.subr.bf16.mxu0 0
        %587 = vmatpush1.bf16.msra.mxu0 0
        %588 = vmatprep.subr.bf16.mxu0 0
        %589 = vmatpush1.bf16.msra.mxu0 0
        %590 = vmatprep.subr.bf16.mxu0 0
        %591 = vmatpush1.bf16.msra.mxu0 0
        %592 = vmatprep.subr.bf16.mxu0 0
        %593 = vmatpush1.bf16.msra.mxu0 0
        %594 = vmatprep.subr.bf16.mxu0 0
        %595 = vmatpush1.bf16.msra.mxu0 0
        %596 = vmatprep.mubr.bf16.mxu0 0
        %597 = vmatmul.mubr.bf16.gmra.mrb[0].mxu0 %v492
        %v598 = vpop.f32.mrb[0].mxu0
        %v599 = vadd.f32 %v514, %v598
        %v600 = vpop.f32.mrb[0].mxu0
        %v601 = vpop.f32.mrb[0].mxu0
        %v602 = vadd.f32 %v514, %v601
        %v603 = vpop.f32.mrb[0].mxu0
        %604 = vdwg.mxu0
        %v605 = vld [vmem:[#allocation7] sm:$0xf]
        %v606 = vld [vmem:[#allocation7 + $0x4] sm:$0xf]
        %v607 = vld [vmem:[#allocation7 + $0x8] sm:$0xf]
        %v608 = vld [vmem:[#allocation7 + $0xc] sm:$0xf]
        %v609 = vld [vmem:[#allocation7 + $0x10] sm:$0xf]
        %v610 = vld [vmem:[#allocation7 + $0x14] sm:$0xf]
        %v611 = vld [vmem:[#allocation7 + $0x18] sm:$0xf]
        %v612 = vld [vmem:[#allocation7 + $0x1c] sm:$0xf]
        %v613 = vld [vmem:[#allocation7 + $0x20] sm:$0xf]
        %v614 = vld [vmem:[#allocation7 + $0x24] sm:$0xf]
        %v615 = vld [vmem:[#allocation7 + $0x28] sm:$0xf]
        %v616 = vld [vmem:[#allocation7 + $0x2c] sm:$0xf]
        %v617 = vld [vmem:[#allocation7 + $0x30] sm:$0xf]
        %v618 = vld [vmem:[#allocation7 + $0x34] sm:$0xf]
        %v619 = vld [vmem:[#allocation7 + $0x38] sm:$0xf]
        %v620 = vld [vmem:[#allocation7 + $0x3c] sm:$0xf]
        %v621 = vld [vmem:[%s6] sm:$0x1]
        %v623 = vlaneseq
        %v624 = vshrl.u32 %v623, 7
        %v625 = vsub.s32 0, %v624
        %v626 = vrot.slane %v621, %v625
        %v644 = vunpack.c.l.b16 %v605
        %v645 = vunpack.c.l.b16 %v606
        %v646 = vunpack.c.l.b16 %v607
        %v647 = vunpack.c.l.b16 %v608
        %v648 = vunpack.c.l.b16 %v609
        %v649 = vunpack.c.l.b16 %v610
        %v650 = vunpack.c.l.b16 %v611
        %v651 = vunpack.c.l.b16 %v612
        %v652 = vunpack.c.l.b16 %v613
        %v653 = vunpack.c.l.b16 %v614
        %v654 = vunpack.c.l.b16 %v615
        %v655 = vunpack.c.l.b16 %v616
        %v656 = vunpack.c.l.b16 %v617
        %v657 = vunpack.c.l.b16 %v618
        %v658 = vunpack.c.l.b16 %v619
        %v659 = vunpack.c.l.b16 %v620
        %v660 = vpack.c.b16 %v645, %v644
        %v661 = vpack.c.b16 %v647, %v646
        %v662 = vpack.c.b16 %v649, %v648
        %v663 = vpack.c.b16 %v651, %v650
        %v664 = vpack.c.b16 %v653, %v652
        %v665 = vpack.c.b16 %v655, %v654
        %v666 = vpack.c.b16 %v657, %v656
        %v667 = vpack.c.b16 %v659, %v658
        %676 = vmatprep.subr.bf16.mxu0 0
        %677 = vmatpush1.bf16.msra.mxu0 %v660
        %678 = vmatprep.subr.bf16.mxu0 0
        %679 = vmatpush1.bf16.msra.mxu0 %v661
        %680 = vmatprep.subr.bf16.mxu0 0
        %681 = vmatpush1.bf16.msra.mxu0 %v662
        %682 = vmatprep.subr.bf16.mxu0 0
        %683 = vmatpush1.bf16.msra.mxu0 %v663
        %684 = vmatprep.subr.bf16.mxu0 0
        %685 = vmatpush1.bf16.msra.mxu0 %v664
        %686 = vmatprep.subr.bf16.mxu0 0
        %687 = vmatpush1.bf16.msra.mxu0 %v665
        %688 = vmatprep.subr.bf16.mxu0 0
        %689 = vmatpush1.bf16.msra.mxu0 %v666
        %690 = vmatprep.subr.bf16.mxu0 0
        %691 = vmatpush1.bf16.msra.mxu0 %v667
        %692 = vmatprep.subr.bf16.mxu0 0
        %693 = vmatpush1.bf16.msra.mxu0 0
        %694 = vmatprep.subr.bf16.mxu0 0
        %695 = vmatpush1.bf16.msra.mxu0 0
        %696 = vmatprep.subr.bf16.mxu0 0
        %697 = vmatpush1.bf16.msra.mxu0 0
        %698 = vmatprep.subr.bf16.mxu0 0
        %699 = vmatpush1.bf16.msra.mxu0 0
        %700 = vmatprep.subr.bf16.mxu0 0
        %701 = vmatpush1.bf16.msra.mxu0 0
        %702 = vmatprep.subr.bf16.mxu0 0
        %703 = vmatpush1.bf16.msra.mxu0 0
        %704 = vmatprep.subr.bf16.mxu0 0
        %705 = vmatpush1.bf16.msra.mxu0 0
        %706 = vmatprep.subr.bf16.mxu0 0
        %707 = vmatpush1.bf16.msra.mxu0 0
        %708 = vmatprep.mubr.bf16.mxu0 0
        %709 = vmatmul.mubr.bf16.gmra.mrb[0].mxu0 %v492
        %v710 = vpop.f32.mrb[0].mxu0
        %v711 = vadd.f32 %v626, %v710
        %v712 = vpop.f32.mrb[0].mxu0
        %v713 = vpop.f32.mrb[0].mxu0
        %v714 = vadd.f32 %v626, %v713
        %v715 = vpop.f32.mrb[0].mxu0
        %716 = vdwg.mxu0
        %v717 = vld [vmem:[#allocation8] sm:$0xf]
        %v718 = vld [vmem:[#allocation8 + $0x4] sm:$0xf]
        %v719 = vld [vmem:[#allocation8 + $0x8] sm:$0xf]
        %v720 = vld [vmem:[#allocation8 + $0xc] sm:$0xf]
        %v721 = vld [vmem:[#allocation8 + $0x10] sm:$0xf]
        %v722 = vld [vmem:[#allocation8 + $0x14] sm:$0xf]
        %v723 = vld [vmem:[#allocation8 + $0x18] sm:$0xf]
        %v724 = vld [vmem:[#allocation8 + $0x1c] sm:$0xf]
        %v725 = vld [vmem:[#allocation8 + $0x20] sm:$0xf]
        %v726 = vld [vmem:[#allocation8 + $0x24] sm:$0xf]
        %v727 = vld [vmem:[#allocation8 + $0x28] sm:$0xf]
        %v728 = vld [vmem:[#allocation8 + $0x2c] sm:$0xf]
        %v729 = vld [vmem:[#allocation8 + $0x30] sm:$0xf]
        %v730 = vld [vmem:[#allocation8 + $0x34] sm:$0xf]
        %v731 = vld [vmem:[#allocation8 + $0x38] sm:$0xf]
        %v732 = vld [vmem:[#allocation8 + $0x3c] sm:$0xf]
        %v733 = vld [vmem:[%s7] sm:$0x1]
        %v735 = vlaneseq
        %v736 = vshrl.u32 %v735, 7
        %v737 = vsub.s32 0, %v736
        %v738 = vrot.slane %v733, %v737
        %v756 = vunpack.c.l.b16 %v717
        %v757 = vunpack.c.l.b16 %v718
        %v758 = vunpack.c.l.b16 %v719
        %v759 = vunpack.c.l.b16 %v720
        %v760 = vunpack.c.l.b16 %v721
        %v761 = vunpack.c.l.b16 %v722
        %v762 = vunpack.c.l.b16 %v723
        %v763 = vunpack.c.l.b16 %v724
        %v764 = vunpack.c.l.b16 %v725
        %v765 = vunpack.c.l.b16 %v726
        %v766 = vunpack.c.l.b16 %v727
        %v767 = vunpack.c.l.b16 %v728
        %v768 = vunpack.c.l.b16 %v729
        %v769 = vunpack.c.l.b16 %v730
        %v770 = vunpack.c.l.b16 %v731
        %v771 = vunpack.c.l.b16 %v732
        %v772 = vpack.c.b16 %v757, %v756
        %v773 = vpack.c.b16 %v759, %v758
        %v774 = vpack.c.b16 %v761, %v760
        %v775 = vpack.c.b16 %v763, %v762
        %v776 = vpack.c.b16 %v765, %v764
        %v777 = vpack.c.b16 %v767, %v766
        %v778 = vpack.c.b16 %v769, %v768
        %v779 = vpack.c.b16 %v771, %v770
        %788 = vmatprep.subr.bf16.mxu0 0
        %789 = vmatpush1.bf16.msra.mxu0 %v772
        %790 = vmatprep.subr.bf16.mxu0 0
        %791 = vmatpush1.bf16.msra.mxu0 %v773
        %792 = vmatprep.subr.bf16.mxu0 0
        %793 = vmatpush1.bf16.msra.mxu0 %v774
        %794 = vmatprep.subr.bf16.mxu0 0
        %795 = vmatpush1.bf16.msra.mxu0 %v775
        %796 = vmatprep.subr.bf16.mxu0 0
        %797 = vmatpush1.bf16.msra.mxu0 %v776
        %798 = vmatprep.subr.bf16.mxu0 0
        %799 = vmatpush1.bf16.msra.mxu0 %v777
        %800 = vmatprep.subr.bf16.mxu0 0
        %801 = vmatpush1.bf16.msra.mxu0 %v778
        %802 = vmatprep.subr.bf16.mxu0 0
        %803 = vmatpush1.bf16.msra.mxu0 %v779
        %804 = vmatprep.subr.bf16.mxu0 0
        %805 = vmatpush1.bf16.msra.mxu0 0
        %806 = vmatprep.subr.bf16.mxu0 0
        %807 = vmatpush1.bf16.msra.mxu0 0
        %808 = vmatprep.subr.bf16.mxu0 0
        %809 = vmatpush1.bf16.msra.mxu0 0
        %810 = vmatprep.subr.bf16.mxu0 0
        %811 = vmatpush1.bf16.msra.mxu0 0
        %812 = vmatprep.subr.bf16.mxu0 0
        %813 = vmatpush1.bf16.msra.mxu0 0
        %814 = vmatprep.subr.bf16.mxu0 0
        %815 = vmatpush1.bf16.msra.mxu0 0
        %816 = vmatprep.subr.bf16.mxu0 0
        %817 = vmatpush1.bf16.msra.mxu0 0
        %818 = vmatprep.subr.bf16.mxu0 0
        %819 = vmatpush1.bf16.msra.mxu0 0
        %820 = vmatprep.mubr.bf16.mxu0 0
        %821 = vmatmul.mubr.bf16.gmra.mrb[0].mxu0 %v492
        %v822 = vpop.f32.mrb[0].mxu0
        %v823 = vadd.f32 %v738, %v822
        %v824 = vpop.f32.mrb[0].mxu0
        %v825 = vpop.f32.mrb[0].mxu0
        %v826 = vadd.f32 %v738, %v825
        %v827 = vpop.f32.mrb[0].mxu0
        %828 = vdwg.mxu0
        %v829 = vmul.f32 %v599, 0.35355338
        %v830 = vmul.f32 %v602, 0.35355338
        %v831 = vpack.c.bf16 %v830, %v829
        %v833 = vunpack.c.l.b16 %v831
        %v834 = vunpack.c.h.b16 %v831
        %v835 = vpack.c.b16 %v833, %v833
        %v836 = vpack.c.b16 %v834, %v834
        %839 = vst [vmem:[%s447] sm:$0xf] %v835
        %840 = vst [vmem:[%s447 + $0x4] sm:$0xf] %v836
        %v841 = vpack.c.bf16 %v714, %v711
        %v843 = vunpack.c.l.b16 %v841
        %v844 = vunpack.c.h.b16 %v841
        %v845 = vpack.c.b16 %v843, %v843
        %v846 = vpack.c.b16 %v844, %v844
        %849 = vst [vmem:[%s454] sm:$0xf] %v845
        %850 = vst [vmem:[%s454 + $0x4] sm:$0xf] %v846
        %v851 = vpack.c.bf16 %v826, %v823
        %v853 = vunpack.c.l.b16 %v851
        %v854 = vunpack.c.h.b16 %v851
        %v855 = vpack.c.b16 %v853, %v853
        %v856 = vpack.c.b16 %v854, %v854
        %859 = vst [vmem:[%s461] sm:$0xf] %v855
        %860 = vst [vmem:[%s461 + $0x4] sm:$0xf] %v856
        %s861 = sand.u32 %s230, 1
        %s862 = scalar_lea.sflag [#allocation4], %s861
        %s863 = sand.u32 %s230, 1
        %s864 = smul.addr %s863, 8
        %s865 = scalar_lea.vmem [#allocation10], %s864
        %s866 = sand.u32 %s33, 1
        %s867 = scalar_lea.sflag [#allocation12], %s866
        %s868 = sand.u32 %s258, 1
        %s869 = smul.addr %s868, 8
        %s870 = scalar_lea.vmem [#allocation11], %s869
        %s871 = sand.u32 %s33, 1
        %s872 = scalar_lea.sflag [#allocation12], %s871
        %s873 = sand.u32 %s286, 1
        %s874 = smul.addr %s873, 8
        %s875 = scalar_lea.vmem [#allocation13], %s874
        // Predicated region
        $region69: #{tpu_custom_call.1} parent=51 // pred_check
          %p876 = pneg %p240
        $region70: #{tpu_custom_call.1} parent=51 // pred_check_branch
          %878 = sbr.rel (%p876) target = $region72
        $region71: #{tpu_custom_call.1} parent=51 // pred_region
          %s879 = smul.u32 2, %s38
          %s881 = ssub.s32 128, 128
          %882 = vsyncadd %s862, %s881
          %s883 = smul.addr %s37, 4
          %s884 = sadd.s32 %s879, %s883
          %s885 = smul.addr %s884, 64
          %s886 = scalar_lea.hbm %s8, %s885
          %s887 = sshll.u32 %s865, 4
          %s888 = int_to_ptr.vmem [resolvable:$true] %s887
          %893 = dma.vmem_to_hbm [thread:$0]  %s888, 128, %s886, %s862, 64, 64, 4
        $region72: #{tpu_custom_call.1} parent=51 // pred_fallthru
          _
        // Predicated region
        $region73: #{tpu_custom_call.1} parent=51 // pred_check
          %p894 = pneg %p268
        $region74: #{tpu_custom_call.1} parent=51 // pred_check_branch
          %896 = sbr.rel (%p894) target = $region76
        $region75: #{tpu_custom_call.1} parent=51 // pred_region
          %s897 = smul.u32 2, %s38
          %s899 = ssub.s32 128, 128
          %900 = vsyncadd %s867, %s899
          %s901 = smul.addr %s37, 4
          %s902 = sadd.s32 %s897, %s901
          %s903 = smul.addr %s902, 64
          %s904 = scalar_lea.hbm %s9, %s903
          %s905 = sshll.u32 %s870, 4
          %s906 = int_to_ptr.vmem [resolvable:$true] %s905
          %911 = dma.vmem_to_hbm [thread:$0]  %s906, 128, %s904, %s867, 64, 64, 4
        $region76: #{tpu_custom_call.1} parent=51 // pred_fallthru
          _
        // Predicated region
        $region77: #{tpu_custom_call.1} parent=51 // pred_check
          %p912 = pneg %p296
        $region78: #{tpu_custom_call.1} parent=51 // pred_check_branch
          %914 = sbr.rel (%p912) target = $region80
        $region79: #{tpu_custom_call.1} parent=51 // pred_region
          %s915 = smul.u32 2, %s38
          %s917 = ssub.s32 128, 128
          %918 = vsyncadd %s872, %s917
          %s919 = smul.addr %s37, 4
          %s920 = sadd.s32 %s915, %s919
          %s921 = smul.addr %s920, 64
          %s922 = scalar_lea.hbm %s10, %s921
          %s923 = sshll.u32 %s875, 4
          %s924 = int_to_ptr.vmem [resolvable:$true] %s923
          %929 = dma.vmem_to_hbm [thread:$0]  %s924, 128, %s922, %s872, 64, 64, 4
        $region80: #{tpu_custom_call.1} parent=51 // pred_fallthru
          _
      $region52: #{tpu_custom_call.1} parent=5 // pred_fallthru
        _
      %p930 = scmp.le.s32.totalorder 2, %s28
      // Predicated region
      $region81: #{tpu_custom_call.1} parent=5 // pred_check
        %p931 = pneg %p930
      $region82: #{tpu_custom_call.1} parent=5 // pred_check_branch
        %933 = sbr.rel (%p931) target = $region84
      $region83: #{tpu_custom_call.1} parent=5 // pred_region
        %s934 = ssub.s32 %s28, 2
        // Predicated region
        $region85: #{tpu_custom_call.1} parent=83 // pred_check
          %p935 = pneg %p246
        $region86: #{tpu_custom_call.1} parent=83 // pred_check_branch
          %937 = sbr.rel (%p935) target = $region88
        $region87: #{tpu_custom_call.1} parent=83 // pred_region
          %s938 = sand.u32 %s231, 1
          %s939 = scalar_lea.sflag [#allocation4], %s938
          %s940 = sand.u32 %s231, 1
          %s941 = smul.addr %s940, 8
          %s942 = scalar_lea.vmem [#allocation10], %s941
          %943 = dma.done %s939, 128
        $region88: #{tpu_custom_call.1} parent=83 // pred_fallthru
          _
        // Predicated region
        $region89: #{tpu_custom_call.1} parent=83 // pred_check
          %p944 = pneg %p274
        $region90: #{tpu_custom_call.1} parent=83 // pred_check_branch
          %946 = sbr.rel (%p944) target = $region92
        $region91: #{tpu_custom_call.1} parent=83 // pred_region
          %s947 = sand.u32 %s34, 1
          %s948 = scalar_lea.sflag [#allocation12], %s947
          %s949 = sand.u32 %s259, 1
          %s950 = smul.addr %s949, 8
          %s951 = scalar_lea.vmem [#allocation11], %s950
          %952 = dma.done %s948, 128
        $region92: #{tpu_custom_call.1} parent=83 // pred_fallthru
          _
        // Predicated region
        $region93: #{tpu_custom_call.1} parent=83 // pred_check
          %p953 = pneg %p302
        $region94: #{tpu_custom_call.1} parent=83 // pred_check_branch
          %955 = sbr.rel (%p953) target = $region96
        $region95: #{tpu_custom_call.1} parent=83 // pred_region
          %s956 = sand.u32 %s34, 1
          %s957 = scalar_lea.sflag [#allocation12], %s956
          %s958 = sand.u32 %s287, 1
          %s959 = smul.addr %s958, 8
          %s960 = scalar_lea.vmem [#allocation13], %s959
          %961 = dma.done %s957, 128
        $region96: #{tpu_custom_call.1} parent=83 // pred_fallthru
          _
      $region84: #{tpu_custom_call.1} parent=5 // pred_fallthru
        _
    $region6: #{tpu_custom_call.1} parent=1 // loop_footer
      %s32 = sadd.s32 1, %s28
    $region7: #{tpu_custom_call.1} parent=1 // loop_footer_branch
      %27 = sbr.rel target = $region3
    $region8: #{tpu_custom_call.1} parent=1 // loop_exit
      _
    %962 = vsyncpa [#allocation3], 1
    %s963 = scalar_lea.sflag [#allocation3], 1
    %964 = vsyncpa %s963, 1
    %965 = vsyncpa [#allocation6], 1
    %966 = vsyncpa [#allocation9], 1
    %967 = vsyncpa [#allocation4], 1
    %s968 = scalar_lea.sflag [#allocation4], 1
    %969 = vsyncpa %s968, 1
    %970 = vsyncpa [#allocation12], 1
    %s971 = scalar_lea.sflag [#allocation12], 1
    %972 = vsyncpa %s971, 1

</llo_original>
